<compile_context>
chip_gen: v6e
topology: v6e:2x2x1
jax: 0.10.0
libtpu: 0.0.40
codegen_flags: <defaults>
</compile_context>

<pallas_src>
import functools
import math

import jax
import jax.numpy as jnp
from jax.experimental import pallas as pl
from jax.experimental.pallas import tpu as pltpu


def _round_up(x, m):
    return ((x + m - 1) // m) * m


# ---------------------------------------------------------------------------
# Kernel 1: factor-only normalize — per-sample sum of squares, tiled over the
# flattened feature dim.  Output (N, 1) f32 accumulates in the resident block.
# ---------------------------------------------------------------------------
def _ssq_kernel(x_ref, ssq_ref):
    @pl.when(pl.program_id(0) == 0)
    def _():
        ssq_ref[...] = jnp.zeros_like(ssq_ref)

    x = x_ref[...].astype(jnp.float32)
    ssq_ref[...] += jnp.sum(x * x, axis=-1, keepdims=True)


def sum_squares_pallas(x2d, max_tile_m=8192):
    """Per-row sum of squares of a (N, M) array, tiled along M; f32 output."""
    n, m = x2d.shape
    tm = m                                        # fallback: single full block
    start = min(max_tile_m, (m // 128) * 128)
    for cand in range(start, 127, -128):          # largest 128-multiple dividing M
        if m % cand == 0:
            tm = cand
            break
    return pl.pallas_call(
        _ssq_kernel,
        grid=(m // tm,),
        in_specs=[pl.BlockSpec((n, tm), lambda j: (0, j))],
        out_specs=pl.BlockSpec((n, 1), lambda j: (0, 0)),
        out_shape=jax.ShapeDtypeStruct((n, 1), jnp.float32),
        compiler_params=pltpu.CompilerParams(dimension_semantics=("arbitrary",)),
    )(x2d)


# ---------------------------------------------------------------------------
# Kernel 2: feature_extractor Conv2d(C, C, 3, padding=1).
# Per-sample grid; the padded NHWC sample arrives flattened row-major (row
# stride = Wp), and the conv is 9 shifted (rows, C) @ (C, Cout) matmuls
# accumulated in f32 — no im2col blob in HBM.
# TODO(synk): for large C, pack taps into K=9*C bf16 operands for better MXU use.
# ---------------------------------------------------------------------------
def _conv3x3_kernel(x_ref, w_ref, b_ref, o_ref, *, wp, hwp, cout):
    # x_ref: (1, R, C); w_ref: (9, C, Cout); b_ref: (1, Cout); o_ref: (1, hwp, Cout)
    acc = jnp.zeros((hwp, cout), jnp.float32)
    for kh in range(3):
        for kw in range(3):
            off = kh * wp + kw
            acc = acc + jnp.dot(x_ref[0, off:off + hwp, :].astype(jnp.float32),
                                w_ref[kh * 3 + kw].astype(jnp.float32),
                                preferred_element_type=jnp.float32)
    o_ref[0] = (acc + b_ref[...].astype(jnp.float32)).astype(o_ref.dtype)


def conv3x3_pallas(x, weight, bias):
    # x: (N, C, H, W) NCHW; weight: (Cout, Cin, 3, 3); bias: (Cout,)
    n, c, h, w = x.shape
    cout = weight.shape[0]
    hp, wp = h + 2, w + 2
    hwp = h * wp                                   # outputs on the padded-width grid
    rows = _round_up(hp * wp + 3, 8)               # shift slack for the 9 taps
    # layout glue on the small template tensor only (no 9x patch tensor)
    xp = jnp.pad(x, ((0, 0), (0, 0), (1, 1), (1, 1))).transpose(0, 2, 3, 1)
    xp = xp.reshape(n, hp * wp, c)
    xp = jnp.pad(xp, ((0, 0), (0, rows - hp * wp), (0, 0)))
    w2 = weight.transpose(2, 3, 1, 0).reshape(9, c, cout)   # (tap, Cin, Cout)
    b2 = bias.reshape(1, cout).astype(jnp.float32)

    kernel = functools.partial(_conv3x3_kernel, wp=wp, hwp=hwp, cout=cout)
    out = pl.pallas_call(
        kernel,
        grid=(n,),
        in_specs=[pl.BlockSpec((1, rows, c), lambda i: (i, 0, 0)),
                  pl.BlockSpec((9, c, cout), lambda i: (0, 0, 0)),
                  pl.BlockSpec((1, cout), lambda i: (0, 0))],
        out_specs=pl.BlockSpec((1, hwp, cout), lambda i: (i, 0, 0)),
        out_shape=jax.ShapeDtypeStruct((n, hwp, cout), jnp.float32),
        compiler_params=pltpu.CompilerParams(dimension_semantics=("parallel",)),
    )(xp, w2, b2)
    out = out.reshape(n, h, wp, cout)[:, :, :w, :]   # drop padded-width columns
    return out.transpose(0, 3, 1, 2).astype(x.dtype)  # back to NCHW


# ---------------------------------------------------------------------------
# Kernel 3: filter_layer.apply_filter — grouped conv2d (groups = num_seq), with
# BOTH normalize factors folded into the (tiny) per-(image, sequence) filter.
# One grid step = one image (all sequences).  Zero padding is built in a VMEM
# scratch laid out (C, flattened padded spatial): spatial in lanes, channels in
# sublanes; the channel reduction is a single sublane reduce; the output store
# is lane-dense (H*Wp wide).
# ---------------------------------------------------------------------------
def _apply_filter_kernel(eff_ref, feat_ref, filt_ref, out_ref, xpad_ref, *,
                         ns, c, h, w, wp, hwp, fh, fw, ph, pw):
    i = pl.program_id(0)
    # zero the padded scratch once per step; the image region is fully
    # overwritten for every sequence, the halo stays zero.
    xpad_ref[...] = jnp.zeros_like(xpad_ref)
    for s in range(ns):
        # in-kernel zero padding: copy each image row into the row-major slab
        for hh in range(h):
            dst = (hh + ph) * wp + pw
            xpad_ref[:, dst:dst + w] = (
                feat_ref[0, s, :, hh * w:(hh + 1) * w].astype(jnp.float32))
        # fold the two normalize factors into the filter (fh*fw*C elements)
        wf = filt_ref[s].astype(jnp.float32) * eff_ref[i * ns + s]   # (C, fh*fw)
        acc = jnp.zeros((c, hwp), jnp.float32)
        for kh in range(fh):
            for kw in range(fw):
                off = kh * wp + kw
                t = kh * fw + kw
                acc = acc + xpad_ref[:, off:off + hwp] * wf[:, t:t + 1]
        row = jnp.sum(acc, axis=0, keepdims=True)            # reduce channels (sublanes)
        out_ref[0, s:s + 1, :] = row.astype(out_ref.dtype)


def apply_filter_pallas(test_feat, weights, eff):
    """Grouped conv2d of RAW test features with eff[i, s] folded into filter s.

    test_feat: (ni*ns, C, H, W); weights: (ns, C, fh, fw); eff: (ni, ns) f32.
    Returns scores (ni, ns, H, W)."""
    ni, ns = eff.shape
    _, c, h, w = test_feat.shape
    _, _, fh, fw = weights.shape
    ph, pw = fh // 2, fw // 2
    hp, wp = h + 2 * ph, w + 2 * pw
    hwp = h * wp                                   # outputs on the padded-width grid
    lp = _round_up(hp * wp + fw, 128)              # scratch lane length (+ shift slack)

    feat = test_feat.reshape(ni, ns, c, h * w)     # trailing-merge reshape, no pad/transpose
    filt = weights.reshape(ns, c, fh * fw)
    eff_flat = eff.reshape(ni * ns).astype(jnp.float32)

    kernel = functools.partial(_apply_filter_kernel, ns=ns, c=c, h=h, w=w,
                               wp=wp, hwp=hwp, fh=fh, fw=fw, ph=ph, pw=pw)
    out = pl.pallas_call(
        kernel,
        grid=(ni,),
        in_specs=[pl.BlockSpec(memory_space=pltpu.MemorySpace.SMEM),
                  pl.BlockSpec((1, ns, c, h * w), lambda i: (i, 0, 0, 0)),
                  pl.BlockSpec((ns, c, fh * fw), lambda i: (0, 0, 0))],
        out_specs=pl.BlockSpec((1, ns, hwp), lambda i: (i, 0, 0)),
        out_shape=jax.ShapeDtypeStruct((ni, ns, hwp), jnp.float32),
        scratch_shapes=[pltpu.VMEM((c, lp), jnp.float32)],
        compiler_params=pltpu.CompilerParams(dimension_semantics=("parallel",)),
    )(eff_flat, feat, filt)
    # drop the padded-width columns and restore (ni, ns, H, W)
    return out.reshape(ni, ns, h, wp)[:, :, :, :w].astype(test_feat.dtype)


# ---------------------------------------------------------------------------
# Module wrapper
# ---------------------------------------------------------------------------
class MultiScaleFilterPallas:
    """filter_optimizer=None, feature_extractor=Conv2d(C, C, 3, padding=1)."""

    def __init__(self, channels, key):
        n = 3 * 3 * channels                              # kH*kW*out_channels (He init)
        self.fe_weight = (jax.random.normal(key, (channels, channels, 3, 3),
                                            jnp.float32) * math.sqrt(2.0 / n))
        self.fe_bias = jnp.zeros((channels,), jnp.float32)

    def forward(self, train_temp, train_feat, test_feat, dist_map, num_seq, num_img):
        c_t, th, tw = train_temp.shape[-3:]
        scale = 1.0 / math.sqrt(c_t * th * tw)

        # --- normalize(train_feat, scale, train_temp): factor only ---
        # (the normalized train_feat is discarded because filter_optimizer is None)
        n_tr, c_f, h, w = train_feat.shape
        ssq_tr = sum_squares_pallas(train_feat.reshape(n_tr, -1))            # (n_tr,1) f32
        fac_tr = scale * jnp.sqrt((c_f * h * w) / (ssq_tr + 1e-5))           # (n_tr,1) f32
        train_temp_n = train_temp * fac_tr[:, :, None, None]                 # tiny, glue

        # --- normalize(test_feat, scale): factor only; the scaling is folded into
        # the classify filter (the grouped conv is linear & bias-free), so the
        # normalized test features are never materialized in HBM.
        n_te = test_feat.shape[0]
        ssq_te = sum_squares_pallas(test_feat.reshape(n_te, -1))[:, 0]       # (n_te,) f32
        fac1 = scale * jnp.sqrt((c_f * h * w) / (ssq_te + 1e-5))             # (n_te,) f32

        # --- feature_extractor(train_temp) -> filter weights ---
        temp_feat = conv3x3_pallas(train_temp_n, self.fe_weight, self.fe_bias)
        weights = temp_feat.reshape(num_img, num_seq, c_t, th, tw).mean(axis=0)

        # --- get_filter: filter_optimizer is None -> iterates = [weights] ---
        # TODO(synk): filter_optimizer branch (steepest-descent iterations) not instantiated here.
        filter_iter = [weights]

        return [self._classify(f, test_feat, fac1, ssq_te, num_img, num_seq)
                for f in filter_iter]

    def _classify(self, weights, test_feat_raw, fac1, ssq_te, num_img, num_seq):
        ns, c, fh, fw = weights.shape
        scale2 = 1.0 / math.sqrt(c * fh * fw)
        ni = num_img
        _, cf, h, w = test_feat_raw.shape
        # The original 5-D normalize() call only broadcasts if num_img == num_seq,
        # and its scale_factor index lands on the SEQUENCE axis — replicated here.
        assert ni == num_seq, "original PyTorch broadcasting requires num_img == num_seq"
        numer2 = num_seq * cf * h                 # shape[1]*shape[2]*shape[3] quirk (omits W)
        # sum of squares of the already-fac1-scaled 5-D features, from raw per-sample ssq
        ssq5 = (fac1 * fac1 * ssq_te).reshape(ni, num_seq).sum(axis=1)       # (ni,) f32
        fac2 = scale2 * jnp.sqrt(numer2 / (ssq5 + 1e-5))                     # (ni,) f32
        # effective scalar per (image, sequence): fac1[i,s] * fac2[s]  (broadcast quirk)
        eff = fac1.reshape(ni, num_seq) * fac2[None, :]                      # (ni, ns) f32
        return apply_filter_pallas(test_feat_raw, weights, eff)


if __name__ == "__main__":
    key = jax.random.PRNGKey(0)
    num_img, num_seq = 2, 2
    C, H, W = 8, 16, 16
    tH = tW = 5                                   # template / filter spatial size (odd -> same-size scores)

    k_w, k_tt, k_tr, k_te = jax.random.split(key, 4)
    model = MultiScaleFilterPallas(C, k_w)

    train_temp = jax.random.normal(k_tt, (num_img * num_seq, C, tH, tW), jnp.float32)
    train_feat = jax.random.normal(k_tr, (num_img * num_seq, C, H, W), jnp.float32)
    test_feat = jax.random.normal(k_te, (num_img * num_seq, C, H, W), jnp.float32)
    dist_map = jnp.zeros((num_seq, H, W), jnp.float32)   # unused: filter_optimizer is None

    scores = model.forward(train_temp, train_feat, test_feat, dist_map, num_seq, num_img)
    scores = jax.block_until_ready(scores)

    assert len(scores) == 1
    assert scores[0].shape == (num_img, num_seq, H, W)
    assert bool(jnp.all(jnp.isfinite(scores[0])))
    print("KERNEL_OK")
</pallas_src>

<mosaic_0001>
module attributes {stable_mosaic.version = 11 : i64} {
  func.func @_ssq_kernel(%arg0: i32, %arg1: memref<4x2048xf32, #tpu.memory_space<vmem>>, %arg2: memref<4x1xf32, #tpu.memory_space<vmem>>) attributes {dimension_semantics = [#tpu.dimension_semantics<arbitrary>], iteration_bounds = array<i64: 1>, scalar_prefetch = 0 : i64, scratch_operands = 0 : i64, tpu.core_type = #tpu.core_type<tc>, window_params = [{transform_indices = @transform_0, window_bounds = array<i64: 4, 2048>}, {pipeline_mode = #tpu.pipeline_mode<synchronous>, transform_indices = @transform_1, window_bounds = array<i64: 4, 1>}]} {
    %c0_i32 = arith.constant 0 : i32
    %0 = arith.cmpi eq, %arg0, %c0_i32 : i32
    %1 = arith.extui %0 : i1 to i32
    %c0_i32_0 = arith.constant 0 : i32
    %2 = arith.cmpi ne, %1, %c0_i32_0 : i32
    scf.if %2 {
      %cst_6 = arith.constant 0.000000e+00 : f32
      %10 = vector.broadcast %cst_6 : f32 to vector<4x1xf32>
      %c0_7 = arith.constant 0 : index
      %c0_8 = arith.constant 0 : index
      %11 = vector.load %arg2[%c0_7, %c0_8] : memref<4x1xf32, #tpu.memory_space<vmem>>, vector<4x1xf32>
      tpu.vector_store %arg2[%c0_7, %c0_8], %10 {strides = array<i32>} : memref<4x1xf32, #tpu.memory_space<vmem>>, vector<4x1xf32>,
    } else {
    }
    %c0 = arith.constant 0 : index
    %c0_1 = arith.constant 0 : index
    %3 = vector.load %arg1[%c0, %c0_1] : memref<4x2048xf32, #tpu.memory_space<vmem>>, vector<4x2048xf32>
    %c0_2 = arith.constant 0 : index
    %c0_3 = arith.constant 0 : index
    %4 = vector.load %arg2[%c0_2, %c0_3] : memref<4x1xf32, #tpu.memory_space<vmem>>, vector<4x1xf32>
    %5 = arith.mulf %3, %3 : vector<4x2048xf32>
    %cst = arith.constant dense<0.000000e+00> : vector<4xf32>
    %6 = vector.multi_reduction <add>, %5, %cst [1] : vector<4x2048xf32> to vector<4xf32>
    %7 = vector.shape_cast %6 : vector<4xf32> to vector<4x1xf32>
    %8 = arith.addf %4, %7 : vector<4x1xf32>
    %c0_4 = arith.constant 0 : index
    %c0_5 = arith.constant 0 : index
    %9 = vector.load %arg2[%c0_4, %c0_5] : memref<4x1xf32, #tpu.memory_space<vmem>>, vector<4x1xf32>
    tpu.vector_store %arg2[%c0_4, %c0_5], %8 {strides = array<i32>} : memref<4x1xf32, #tpu.memory_space<vmem>>, vector<4x1xf32>,
    return
  }
  func.func @transform_0(%arg0: i32) -> (i32, i32) {
    %c0_i32 = arith.constant 0 : i32
    %c0_i32_0 = arith.constant 0 : i32
    return %c0_i32, %arg0 : i32, i32
  }
  func.func @transform_1(%arg0: i32) -> (i32, i32) {
    %c0_i32 = arith.constant 0 : i32
    %c0_i32_0 = arith.constant 0 : i32
    %c0_i32_1 = arith.constant 0 : i32
    return %c0_i32, %c0_i32_0 : i32, i32
  }
}

</mosaic_0001>

<llo_original>
// kernel: tpu_custom_call.1
$region0: #{tpu_custom_call.1}
  #allocation0 [shape = 'u32[]', space=smem, size = 0x4, offset = 0x4, fixed_abs, tag = 'smem constant byte address 0x4 - core index']
  #allocation1 [shape = 'u32[144,128]{1,0:T(1,128)}', space=vmem, size = 0x12000, scoped, tag = 'internal scratch']
  %s0 = inlined_call_operand.hbm [shape: f32[4,2048], index: 0, kind: input, shape index: {}]
  %s1 = inlined_call_operand.vmem [shape: f32[4,1], index: 1, kind: output, shape index: {}]
  %s2 = sld [smem:[#allocation0]]
  $region22: #{tpu_custom_call.1} parent=0
    _
  %s4 = ssub.s32 1, %s2
  %s5 = scalar_select 0, %s4, %s2
  $region1: #{tpu_custom_call.1} parent=0
    #allocation2 [shape = 'u8[32768]{0}', space=vmem, size = 0x8000, scoped, tag = 'input window, operand 0, single buffered']
    #allocation3 [shape = 's32[1]{0}', space=sflag, size = 0x4, scoped, tag = 'scoped memory for tpu_custom_call.1']
    %6 = vsyncpa [#allocation3], 0
    // Predicated region
    $region2: #{tpu_custom_call.1} parent=1 // pred_check
      _
    $region3: #{tpu_custom_call.1} parent=1 // pred_check_branch
      %8 = sbr.rel (0) target = $region5
    $region4: #{tpu_custom_call.1} parent=1 // pred_region
      %s10 = ssub.s32 1024, 1024
      %11 = vsyncadd [#allocation3], %s10
      %s13 = sshll.u32 [#allocation2], 4
      %s14 = int_to_ptr.vmem [resolvable:$true] %s13
      %16 = dma.hbm_to_vmem [thread:$0]  %s0, 1024, %s14, [#allocation3]
    $region5: #{tpu_custom_call.1} parent=1 // pred_fallthru
      _
    // Predicated region
    $region6: #{tpu_custom_call.1} parent=1 // pred_check
      _
    $region7: #{tpu_custom_call.1} parent=1 // pred_check_branch
      %18 = sbr.rel (0) target = $region9
    $region8: #{tpu_custom_call.1} parent=1 // pred_region
      %19 = dma.done [#allocation3], 1024
    $region9: #{tpu_custom_call.1} parent=1 // pred_fallthru
      _
    %p20 = scmp.eq.s32.totalorder 0, 0
    // Predicated region
    $region10: #{tpu_custom_call.1} parent=1 // pred_check
      %p21 = pneg %p20
    $region11: #{tpu_custom_call.1} parent=1 // pred_check_branch
      %23 = sbr.rel (%p21) target = $region13
    $region12: #{tpu_custom_call.1} parent=1 // pred_region
      %vm24 = vcmask 3072
      %25 = vst.msk [vmem:[%s1] sm:$0xf] %vm24, 0.0
    $region13: #{tpu_custom_call.1} parent=1 // pred_fallthru
      _
    %v26 = vld [vmem:[#allocation2] sm:$0xff]
    %v27 = vld [vmem:[#allocation2 + $0x8] sm:$0xff]
    %v28 = vld [vmem:[#allocation2 + $0x10] sm:$0xff]
    %v29 = vld [vmem:[#allocation2 + $0x18] sm:$0xff]
    %v30 = vld [vmem:[#allocation2 + $0x20] sm:$0xff]
    %v31 = vld [vmem:[#allocation2 + $0x28] sm:$0xff]
    %v32 = vld [vmem:[#allocation2 + $0x30] sm:$0xff]
    %v33 = vld [vmem:[#allocation2 + $0x38] sm:$0xff]
    %v34 = vld [vmem:[%s1] sm:$0xf]
    %v35 = vmul.f32 %v26, %v26
    %v36 = vmul.f32 %v27, %v27
    %v37 = vmul.f32 %v28, %v28
    %v38 = vmul.f32 %v29, %v29
    %v39 = vmul.f32 %v30, %v30
    %v40 = vmul.f32 %v31, %v31
    %v41 = vmul.f32 %v32, %v32
    %v42 = vmul.f32 %v33, %v33
    %v51 = vcombine.high %v35, %v35
    %v52 = vcombine.high %v36, %v36
    %v53 = vcombine.high %v37, %v37
    %v54 = vcombine.high %v38, %v38
    %v55 = vcombine.high %v39, %v39
    %v56 = vcombine.high %v40, %v40
    %v57 = vcombine.high %v41, %v41
    %v58 = vcombine.high %v42, %v42
    %vm67 = vcmask 1043456
    %v68 = vsel %vm67, %v35, 0.0
    %v69 = vsel %vm67, %v51, 0.0
    %v70 = vadd.f32 %v68, %v69
    %v71 = vsel %vm67, %v36, 0.0
    %v72 = vadd.f32 %v70, %v71
    %v73 = vsel %vm67, %v52, 0.0
    %v74 = vadd.f32 %v72, %v73
    %v75 = vsel %vm67, %v37, 0.0
    %v76 = vadd.f32 %v74, %v75
    %v77 = vsel %vm67, %v53, 0.0
    %v78 = vadd.f32 %v76, %v77
    %v79 = vsel %vm67, %v38, 0.0
    %v80 = vadd.f32 %v78, %v79
    %v81 = vsel %vm67, %v54, 0.0
    %v82 = vadd.f32 %v80, %v81
    %v83 = vsel %vm67, %v39, 0.0
    %v84 = vadd.f32 %v82, %v83
    %v85 = vsel %vm67, %v55, 0.0
    %v86 = vadd.f32 %v84, %v85
    %v87 = vsel %vm67, %v40, 0.0
    %v88 = vadd.f32 %v86, %v87
    %v89 = vsel %vm67, %v56, 0.0
    %v90 = vadd.f32 %v88, %v89
    %v91 = vsel %vm67, %v41, 0.0
    %v92 = vadd.f32 %v90, %v91
    %v93 = vsel %vm67, %v57, 0.0
    %v94 = vadd.f32 %v92, %v93
    %v95 = vsel %vm67, %v42, 0.0
    %v96 = vadd.f32 %v94, %v95
    %v97 = vsel %vm67, %v58, 0.0
    %v98 = vadd.f32 %v96, %v97
    %99 = vadd.xlane.f32.xlu0 %v98
    %v100 = vpop.xlane.xlu0 %99
    %v101 = vadd.f32 %v34, %v100
    %vm102 = vcmask 3072
    %103 = vst.msk [vmem:[%s1] sm:$0xf] %vm102, %v101
    // Predicated region
    $region14: #{tpu_custom_call.1} parent=1 // pred_check
      _
    $region15: #{tpu_custom_call.1} parent=1 // pred_check_branch
      %105 = sbr.rel (0) target = $region17
    $region16: #{tpu_custom_call.1} parent=1 // pred_region
      _
    $region17: #{tpu_custom_call.1} parent=1 // pred_fallthru
      _
    // Predicated region
    $region18: #{tpu_custom_call.1} parent=1 // pred_check
      _
    $region19: #{tpu_custom_call.1} parent=1 // pred_check_branch
      %107 = sbr.rel (0) target = $region21
    $region20: #{tpu_custom_call.1} parent=1 // pred_region
      _
    $region21: #{tpu_custom_call.1} parent=1 // pred_fallthru
      _
    %108 = vsyncpa [#allocation3], 1

</llo_original>
